<compile_context>
chip_gen: v7x
topology: tpu7x:2x2x1
jax: 0.10.0
libtpu: 0.0.40
codegen_flags: <defaults>
</compile_context>

<pallas_src>
import math

import jax
import jax.numpy as jnp
from jax.experimental import pallas as pl
from jax.experimental.pallas import tpu as pltpu

STATE_DIM = 8
ACTION_DIM = 1
H1 = 64
H2 = 32
NEG_SLOPE = 0.01  # F.leaky_relu default negative_slope


def _leaky_relu(x):
    # Identical to where(x>0, x, a*x) for 0 < a < 1, one fewer VALU op.
    return jnp.maximum(x, NEG_SLOPE * x)


def _round_up(v, m):
    return ((v + m - 1) // m) * m


def _choose_tile(B, tile_b):
    """Batch tile (lane axis of the output). Multiple of 128 unless a single
    full-extent block covers the whole batch."""
    tile_b = max(128, _round_up(int(tile_b), 128))
    # Aim for >= 4 grid steps on large batches (v7x megacore), capped at tile_b
    # to amortize per-grid-step overhead and stay well inside scoped VMEM.
    quarter = _round_up(pl.cdiv(B, 4), 128)
    tile = min(tile_b, quarter)
    if tile >= B:
        return B  # single block == full array dims -> no (8,128) constraint
    return tile


def qnet_kernel(x_ref, w1_ref, b1_ref, w2_ref, b2_ref, w3t_ref, b3_ref, o_ref):
    # x_ref: (tile, S) in native layout; batch moves to lanes via the first dot.
    x = x_ref[...]
    w1 = w1_ref[...]                       # (H1, S), possibly bf16
    xm = x if x.dtype == w1.dtype else x.astype(w1.dtype)
    # fc_1: contract the S dims -> (H1, tile); f32 accumulation on the MXU.
    h1 = jax.lax.dot_general(
        w1, xm, dimension_numbers=(((1,), (1,)), ((), ())),
        preferred_element_type=jnp.float32) + b1_ref[...]
    h1 = _leaky_relu(h1)                   # f32 VPU work

    w2 = w2_ref[...]                       # (H2, H1), possibly bf16
    h1m = h1 if h1.dtype == w2.dtype else h1.astype(w2.dtype)
    # fc_2: (H2, H1) @ (H1, tile) -> (H2, tile)
    h2 = jnp.dot(w2, h1m, preferred_element_type=jnp.float32) + b2_ref[...]
    h2 = _leaky_relu(h2)                   # f32

    w3t = w3t_ref[...]                     # (H2, A), kept f32
    if w3t_ref.shape[1] == 1:
        # A == 1: VPU broadcast-mul + sublane reduce; MXU would waste 127 cols.
        q = jnp.sum(h2 * w3t, axis=0, keepdims=True) + b3_ref[...]
    else:
        q = jax.lax.dot_general(
            w3t.astype(h2.dtype), h2,
            dimension_numbers=(((0,), (0,)), ((), ())),
            preferred_element_type=jnp.float32) + b3_ref[...]
    o_ref[...] = q.astype(o_ref.dtype)


def qnetwork_forward(x, params, *, tile_b=4096, use_bf16=True):
    """x: (B, state_dim) float32. params in PyTorch layout. Returns (B, action_dim)."""
    w1, b1, w2, b2, w3, b3 = params  # w: (out_f, in_f), b: (out_f,)
    B, S = x.shape
    A = w3.shape[0]

    tile = _choose_tile(B, tile_b)
    grid = (pl.cdiv(B, tile),)

    mx_dtype = jnp.bfloat16 if use_bf16 else jnp.float32
    w1m = w1.astype(mx_dtype)     # MXU operands (tiny, resident in VMEM)
    w2m = w2.astype(mx_dtype)
    b1c = b1.reshape(-1, 1).astype(jnp.float32)   # (H1, 1) broadcast over lanes
    b2c = b2.reshape(-1, 1).astype(jnp.float32)   # (H2, 1)
    b3c = b3.reshape(-1, 1).astype(jnp.float32)   # (A, 1)
    w3t = w3.T.astype(jnp.float32)                # (H2, A) stays f32 (VPU path)

    out = pl.pallas_call(
        qnet_kernel,
        out_shape=jax.ShapeDtypeStruct((A, B), jnp.float32),
        grid=grid,
        in_specs=[
            pl.BlockSpec((tile, S), lambda i: (i, 0)),      # x tile, native layout
            pl.BlockSpec(w1m.shape, lambda i: (0, 0)),      # w1 (H1, S)
            pl.BlockSpec(b1c.shape, lambda i: (0, 0)),      # b1 (H1, 1)
            pl.BlockSpec(w2m.shape, lambda i: (0, 0)),      # w2 (H2, H1)
            pl.BlockSpec(b2c.shape, lambda i: (0, 0)),      # b2 (H2, 1)
            pl.BlockSpec(w3t.shape, lambda i: (0, 0)),      # w3^T (H2, A)
            pl.BlockSpec(b3c.shape, lambda i: (0, 0)),      # b3 (A, 1)
        ],
        out_specs=pl.BlockSpec((A, tile), lambda i: (0, i)),  # lane-dense output
        compiler_params=pltpu.CompilerParams(
            dimension_semantics=("parallel",)),
    )(x, w1m, b1c, w2m, b2c, w3t, b3c)

    return out.T  # (B, A)


def init_qnetwork_params(key, state_dim=STATE_DIM, action_dim=ACTION_DIM):
    """Deterministic init matching nn.Linear's default: U(-1/sqrt(fan_in), +).

    Weights are kept in PyTorch layout: w (out_features, in_features), b (out_features,).
    """
    def linear(k, fan_in, fan_out):
        kw, kb = jax.random.split(k)
        bound = 1.0 / math.sqrt(fan_in)
        w = jax.random.uniform(kw, (fan_out, fan_in), jnp.float32, -bound, bound)
        b = jax.random.uniform(kb, (fan_out,), jnp.float32, -bound, bound)
        return w, b

    k1, k2, k3 = jax.random.split(key, 3)
    w1, b1 = linear(k1, state_dim, H1)
    w2, b2 = linear(k2, H1, H2)
    w3, b3 = linear(k3, H2, action_dim)
    return (w1, b1, w2, b2, w3, b3)


def qnetwork_reference(x, params):
    """Pure-JAX f32 reference of the PyTorch forward pass (x @ W.T + b)."""
    w1, b1, w2, b2, w3, b3 = params
    h = _leaky_relu(x @ w1.T + b1)
    h = _leaky_relu(h @ w2.T + b2)
    return h @ w3.T + b3


# TODO(synk): the module's optim.Adam optimizer / training step is host-side
# state and has no Pallas forward-pass equivalent; only forward() is kernelized.

if __name__ == "__main__":
    key = jax.random.PRNGKey(0)
    kparam, kx1, kx2 = jax.random.split(key, 3)

    params = init_qnetwork_params(kparam)

    # Small deterministic example matching the module's forward signature.
    batch = 2
    x = jax.random.normal(kx1, (batch, STATE_DIM), dtype=jnp.float32)

    # Exact f32 path: must match the torch-equivalent reference tightly.
    q_f32 = jax.block_until_ready(qnetwork_forward(x, params, use_bf16=False))
    q_ref = qnetwork_reference(x, params)
    assert q_f32.shape == (batch, ACTION_DIM), q_f32.shape
    assert jnp.allclose(q_f32, q_ref, atol=1e-5, rtol=1e-5), "f32 mismatch vs reference"

    # Default (bf16-MXU) path: slightly looser tolerance.
    q_bf = jax.block_until_ready(qnetwork_forward(x, params))
    assert jnp.allclose(q_bf, q_ref, atol=5e-2, rtol=5e-2), "bf16 mismatch vs reference"

    # Exercise multiple grid steps + ragged (overhanging) last block.
    batch2 = 300
    x2 = jax.random.normal(kx2, (batch2, STATE_DIM), dtype=jnp.float32)
    q2_ref = qnetwork_reference(x2, params)

    q2_f32 = jax.block_until_ready(
        qnetwork_forward(x2, params, tile_b=128, use_bf16=False))
    assert q2_f32.shape == (batch2, ACTION_DIM), q2_f32.shape
    assert jnp.allclose(q2_f32, q2_ref, atol=1e-5, rtol=1e-5), "f32 mismatch (batch2)"

    q2_bf = jax.block_until_ready(qnetwork_forward(x2, params, tile_b=128))
    assert jnp.allclose(q2_bf, q2_ref, atol=5e-2, rtol=5e-2), "bf16 mismatch (batch2)"

    print("KERNEL_OK")
</pallas_src>

<mosaic_0001>
module attributes {stable_mosaic.version = 11 : i64} {
  func.func @qnet_kernel(%arg0: i32, %arg1: memref<2x8xf32, #tpu.memory_space<vmem>>, %arg2: memref<64x8xf32, #tpu.memory_space<vmem>>, %arg3: memref<64x1xf32, #tpu.memory_space<vmem>>, %arg4: memref<32x64xf32, #tpu.memory_space<vmem>>, %arg5: memref<32x1xf32, #tpu.memory_space<vmem>>, %arg6: memref<32x1xf32, #tpu.memory_space<vmem>>, %arg7: memref<1x1xf32, #tpu.memory_space<vmem>>, %arg8: memref<1x2xf32, #tpu.memory_space<vmem>>) attributes {dimension_semantics = [#tpu.dimension_semantics<parallel>], iteration_bounds = array<i64: 1>, scalar_prefetch = 0 : i64, scratch_operands = 0 : i64, tpu.core_type = #tpu.core_type<tc>, window_params = [{transform_indices = @transform_0, window_bounds = array<i64: 2, 8>}, {pipeline_mode = #tpu.pipeline_mode<synchronous>, transform_indices = @transform_1, window_bounds = array<i64: 64, 8>}, {pipeline_mode = #tpu.pipeline_mode<synchronous>, transform_indices = @transform_2, window_bounds = array<i64: 64, 1>}, {pipeline_mode = #tpu.pipeline_mode<synchronous>, transform_indices = @transform_3, window_bounds = array<i64: 32, 64>}, {pipeline_mode = #tpu.pipeline_mode<synchronous>, transform_indices = @transform_4, window_bounds = array<i64: 32, 1>}, {pipeline_mode = #tpu.pipeline_mode<synchronous>, transform_indices = @transform_5, window_bounds = array<i64: 32, 1>}, {pipeline_mode = #tpu.pipeline_mode<synchronous>, transform_indices = @transform_6, window_bounds = array<i64: 1, 1>}, {transform_indices = @transform_7, window_bounds = array<i64: 1, 2>}]} {
    %c0 = arith.constant 0 : index
    %c0_0 = arith.constant 0 : index
    %0 = vector.load %arg1[%c0, %c0_0] : memref<2x8xf32, #tpu.memory_space<vmem>>, vector<2x8xf32>
    %c0_1 = arith.constant 0 : index
    %c0_2 = arith.constant 0 : index
    %1 = vector.load %arg2[%c0_1, %c0_2] : memref<64x8xf32, #tpu.memory_space<vmem>>, vector<64x8xf32>
    %cst = arith.constant dense<0.000000e+00> : vector<64x2xf32>
    %2 = tpu.matmul %1, %0, %cst {dimension_numbers = #tpu.dot_dimension_numbers<[1], [1], [0], [0], [0, 0, 1, 0], [], []>} : vector<64x8xf32>, vector<2x8xf32>, vector<64x2xf32> -> vector<64x2xf32>
    %c0_3 = arith.constant 0 : index
    %c0_4 = arith.constant 0 : index
    %3 = vector.load %arg3[%c0_3, %c0_4] : memref<64x1xf32, #tpu.memory_space<vmem>>, vector<64x1xf32>
    %4 = vector.broadcast %3 : vector<64x1xf32> to vector<64x2xf32>
    %5 = arith.addf %2, %4 : vector<64x2xf32>
    %cst_5 = arith.constant 0.00999999977 : f32
    %6 = vector.broadcast %cst_5 : f32 to vector<64x2xf32>
    %7 = arith.mulf %6, %5 : vector<64x2xf32>
    %8 = arith.maximumf %5, %7 : vector<64x2xf32>
    %c0_6 = arith.constant 0 : index
    %c0_7 = arith.constant 0 : index
    %9 = vector.load %arg4[%c0_6, %c0_7] : memref<32x64xf32, #tpu.memory_space<vmem>>, vector<32x64xf32>
    %cst_8 = arith.constant dense<0.000000e+00> : vector<32x2xf32>
    %10 = tpu.matmul %9, %8, %cst_8 {dimension_numbers = #tpu.dot_dimension_numbers<[1], [0], [0], [1], [0, 0, 1, 1], [], []>} : vector<32x64xf32>, vector<64x2xf32>, vector<32x2xf32> -> vector<32x2xf32>
    %c0_9 = arith.constant 0 : index
    %c0_10 = arith.constant 0 : index
    %11 = vector.load %arg5[%c0_9, %c0_10] : memref<32x1xf32, #tpu.memory_space<vmem>>, vector<32x1xf32>
    %12 = vector.broadcast %11 : vector<32x1xf32> to vector<32x2xf32>
    %13 = arith.addf %10, %12 : vector<32x2xf32>
    %cst_11 = arith.constant 0.00999999977 : f32
    %14 = vector.broadcast %cst_11 : f32 to vector<32x2xf32>
    %15 = arith.mulf %14, %13 : vector<32x2xf32>
    %16 = arith.maximumf %13, %15 : vector<32x2xf32>
    %c0_12 = arith.constant 0 : index
    %c0_13 = arith.constant 0 : index
    %17 = vector.load %arg6[%c0_12, %c0_13] : memref<32x1xf32, #tpu.memory_space<vmem>>, vector<32x1xf32>
    %18 = vector.broadcast %17 : vector<32x1xf32> to vector<32x2xf32>
    %19 = arith.mulf %16, %18 : vector<32x2xf32>
    %cst_14 = arith.constant dense<0.000000e+00> : vector<2xf32>
    %20 = vector.multi_reduction <add>, %19, %cst_14 [0] : vector<32x2xf32> to vector<2xf32>
    %21 = vector.shape_cast %20 : vector<2xf32> to vector<1x2xf32>
    %c0_15 = arith.constant 0 : index
    %c0_16 = arith.constant 0 : index
    %22 = vector.load %arg7[%c0_15, %c0_16] : memref<1x1xf32, #tpu.memory_space<vmem>>, vector<1x1xf32>
    %23 = vector.broadcast %22 : vector<1x1xf32> to vector<1x2xf32>
    %24 = arith.addf %21, %23 : vector<1x2xf32>
    %c0_17 = arith.constant 0 : index
    %c0_18 = arith.constant 0 : index
    %25 = vector.load %arg8[%c0_17, %c0_18] : memref<1x2xf32, #tpu.memory_space<vmem>>, vector<1x2xf32>
    tpu.vector_store %arg8[%c0_17, %c0_18], %24 {strides = array<i32>} : memref<1x2xf32, #tpu.memory_space<vmem>>, vector<1x2xf32>,
    return
  }
  func.func @transform_0(%arg0: i32) -> (i32, i32) {
    %c0_i32 = arith.constant 0 : i32
    %c0_i32_0 = arith.constant 0 : i32
    return %arg0, %c0_i32 : i32, i32
  }
  func.func @transform_1(%arg0: i32) -> (i32, i32) {
    %c0_i32 = arith.constant 0 : i32
    %c0_i32_0 = arith.constant 0 : i32
    %c0_i32_1 = arith.constant 0 : i32
    return %c0_i32, %c0_i32_0 : i32, i32
  }
  func.func @transform_2(%arg0: i32) -> (i32, i32) {
    %c0_i32 = arith.constant 0 : i32
    %c0_i32_0 = arith.constant 0 : i32
    %c0_i32_1 = arith.constant 0 : i32
    return %c0_i32, %c0_i32_0 : i32, i32
  }
  func.func @transform_3(%arg0: i32) -> (i32, i32) {
    %c0_i32 = arith.constant 0 : i32
    %c0_i32_0 = arith.constant 0 : i32
    %c0_i32_1 = arith.constant 0 : i32
    return %c0_i32, %c0_i32_0 : i32, i32
  }
  func.func @transform_4(%arg0: i32) -> (i32, i32) {
    %c0_i32 = arith.constant 0 : i32
    %c0_i32_0 = arith.constant 0 : i32
    %c0_i32_1 = arith.constant 0 : i32
    return %c0_i32, %c0_i32_0 : i32, i32
  }
  func.func @transform_5(%arg0: i32) -> (i32, i32) {
    %c0_i32 = arith.constant 0 : i32
    %c0_i32_0 = arith.constant 0 : i32
    %c0_i32_1 = arith.constant 0 : i32
    return %c0_i32, %c0_i32_0 : i32, i32
  }
  func.func @transform_6(%arg0: i32) -> (i32, i32) {
    %c0_i32 = arith.constant 0 : i32
    %c0_i32_0 = arith.constant 0 : i32
    %c0_i32_1 = arith.constant 0 : i32
    return %c0_i32, %c0_i32_0 : i32, i32
  }
  func.func @transform_7(%arg0: i32) -> (i32, i32) {
    %c0_i32 = arith.constant 0 : i32
    %c0_i32_0 = arith.constant 0 : i32
    return %c0_i32, %arg0 : i32, i32
  }
}

</mosaic_0001>

<llo_original>
// kernel: tpu_custom_call.1
$region0: #{tpu_custom_call.1}
  #allocation0 [shape = 'u32[]', space=smem, size = 0x4, offset = 0x4, fixed_abs, tag = 'smem constant byte address 0x4 - core index']
  #allocation1 [shape = 'u32[144,128]{1,0:T(1,128)}', space=vmem, size = 0x12000, scoped, tag = 'internal scratch']
  #allocation2 [shape = 'f32[1,1]{1,0:T(1,128)S(1)}', space=vmem, size = 0x200, scoped, tag = 'scoped memory for tpu_custom_call.1']
  %s0 = inlined_call_operand.vmem [shape: f32[2,8], index: 0, kind: input, shape index: {}]
  %s1 = inlined_call_operand.vmem [shape: f32[64,8], index: 1, kind: input, shape index: {}]
  %s2 = inlined_call_operand.vmem [shape: f32[64,1], index: 2, kind: input, shape index: {}]
  %s3 = inlined_call_operand.vmem [shape: f32[32,64], index: 3, kind: input, shape index: {}]
  %s4 = inlined_call_operand.vmem [shape: f32[32,1], index: 4, kind: input, shape index: {}]
  %s5 = inlined_call_operand.vmem [shape: f32[32,1], index: 5, kind: input, shape index: {}]
  %s6 = inlined_call_operand.<no memory space> [shape: f32[1,1], index: 6, kind: input, shape index: {}]
  %s7 = inlined_call_operand.hbm [shape: f32[1,2], index: 7, kind: output, shape index: {}]
  %s8 = sld [smem:[#allocation0]]
  $region38: #{tpu_custom_call.1} parent=0
    _
  %s10 = ssub.s32 1, %s8
  %s11 = scalar_select 0, %s10, %s8
  %v12 = vstv %s6
  %13 = vst [vmem:[#allocation2] sm:$0x1] %v12
  $region1: #{tpu_custom_call.1} parent=0
    #allocation3 [shape = 'u8[512]{0}', space=vmem, size = 0x400, scoped, tag = 'output window, operand 0, single buffered']
    #allocation4 [shape = 's32[1]{0}', space=sflag, size = 0x4, scoped, tag = 'scoped memory for tpu_custom_call.1']
    %14 = vsyncpa [#allocation4], 0
    // Predicated region
    $region2: #{tpu_custom_call.1} parent=1 // pred_check
      _
    $region3: #{tpu_custom_call.1} parent=1 // pred_check_branch
      %16 = sbr.rel (0) target = $region5
    $region4: #{tpu_custom_call.1} parent=1 // pred_region
      _
    $region5: #{tpu_custom_call.1} parent=1 // pred_fallthru
      _
    // Predicated region
    $region6: #{tpu_custom_call.1} parent=1 // pred_check
      _
    $region7: #{tpu_custom_call.1} parent=1 // pred_check_branch
      %18 = sbr.rel (0) target = $region9
    $region8: #{tpu_custom_call.1} parent=1 // pred_region
      _
    $region9: #{tpu_custom_call.1} parent=1 // pred_fallthru
      _
    // Predicated region
    $region10: #{tpu_custom_call.1} parent=1 // pred_check
      _
    $region11: #{tpu_custom_call.1} parent=1 // pred_check_branch
      %20 = sbr.rel (0) target = $region13
    $region12: #{tpu_custom_call.1} parent=1 // pred_region
      _
    $region13: #{tpu_custom_call.1} parent=1 // pred_fallthru
      _
    // Predicated region
    $region14: #{tpu_custom_call.1} parent=1 // pred_check
      _
    $region15: #{tpu_custom_call.1} parent=1 // pred_check_branch
      %22 = sbr.rel (0) target = $region17
    $region16: #{tpu_custom_call.1} parent=1 // pred_region
      _
    $region17: #{tpu_custom_call.1} parent=1 // pred_fallthru
      _
    // Predicated region
    $region18: #{tpu_custom_call.1} parent=1 // pred_check
      _
    $region19: #{tpu_custom_call.1} parent=1 // pred_check_branch
      %24 = sbr.rel (0) target = $region21
    $region20: #{tpu_custom_call.1} parent=1 // pred_region
      _
    $region21: #{tpu_custom_call.1} parent=1 // pred_fallthru
      _
    // Predicated region
    $region22: #{tpu_custom_call.1} parent=1 // pred_check
      _
    $region23: #{tpu_custom_call.1} parent=1 // pred_check_branch
      %26 = sbr.rel (0) target = $region25
    $region24: #{tpu_custom_call.1} parent=1 // pred_region
      _
    $region25: #{tpu_custom_call.1} parent=1 // pred_fallthru
      _
    // Predicated region
    $region26: #{tpu_custom_call.1} parent=1 // pred_check
      _
    $region27: #{tpu_custom_call.1} parent=1 // pred_check_branch
      %28 = sbr.rel (0) target = $region29
    $region28: #{tpu_custom_call.1} parent=1 // pred_region
      _
    $region29: #{tpu_custom_call.1} parent=1 // pred_fallthru
      _
    %v29 = vld [vmem:[%s0] sm:$0x3]
    %v30 = vld [vmem:[%s1] sm:$0xff]
    %v31 = vld [vmem:[%s1 + $0x8] sm:$0xff]
    %v32 = vld [vmem:[%s1 + $0x10] sm:$0xff]
    %v33 = vld [vmem:[%s1 + $0x18] sm:$0xff]
    %v34 = vld [vmem:[%s1 + $0x20] sm:$0xff]
    %v35 = vld [vmem:[%s1 + $0x28] sm:$0xff]
    %v36 = vld [vmem:[%s1 + $0x30] sm:$0xff]
    %v37 = vld [vmem:[%s1 + $0x38] sm:$0xff]
    %v38 = vld [vmem:[%s2] sm:$0xff]
    %v39 = vld [vmem:[%s2 + $0x8] sm:$0xff]
    %v40 = vld [vmem:[%s2 + $0x10] sm:$0xff]
    %v41 = vld [vmem:[%s2 + $0x18] sm:$0xff]
    %v42 = vld [vmem:[%s2 + $0x20] sm:$0xff]
    %v43 = vld [vmem:[%s2 + $0x28] sm:$0xff]
    %v44 = vld [vmem:[%s2 + $0x30] sm:$0xff]
    %v45 = vld [vmem:[%s2 + $0x38] sm:$0xff]
    %47 = vset.pattern.permute.xlu0 0
    %48 = vperm.xlu0 %47, %v38
    %v49 = vpop.permute.xlu0 %48
    %52 = vset.pattern.permute.xlu0 0
    %53 = vperm.xlu0 %52, %v39
    %v54 = vpop.permute.xlu0 %53
    %57 = vset.pattern.permute.xlu0 0
    %58 = vperm.xlu0 %57, %v40
    %v59 = vpop.permute.xlu0 %58
    %62 = vset.pattern.permute.xlu0 0
    %63 = vperm.xlu0 %62, %v41
    %v64 = vpop.permute.xlu0 %63
    %67 = vset.pattern.permute.xlu0 0
    %68 = vperm.xlu0 %67, %v42
    %v69 = vpop.permute.xlu0 %68
    %72 = vset.pattern.permute.xlu0 0
    %73 = vperm.xlu0 %72, %v43
    %v74 = vpop.permute.xlu0 %73
    %77 = vset.pattern.permute.xlu0 0
    %78 = vperm.xlu0 %77, %v44
    %v79 = vpop.permute.xlu0 %78
    %82 = vset.pattern.permute.xlu0 0
    %83 = vperm.xlu0 %82, %v45
    %v84 = vpop.permute.xlu0 %83
    %vm86 = vcmask 64512
    %v88 = vsel %vm86, %v30, 0
    %v91 = vsel %vm86, %v31, 0
    %v94 = vsel %vm86, %v32, 0
    %v97 = vsel %vm86, %v33, 0
    %v100 = vsel %vm86, %v34, 0
    %v103 = vsel %vm86, %v35, 0
    %v106 = vsel %vm86, %v36, 0
    %v109 = vsel %vm86, %v37, 0
    %v112 = vsel %vm86, %v29, 0
    %114 = vmatprep.subr.mxu0 0.0
    %115 = vmatpush1.xpose.msra.mxu0 %v112
    %116 = vmatprep.subr.mxu0 0.0
    %117 = vmatpush1.xpose.msra.mxu0 0.0
    %118 = vmatprep.subr.mxu0 0.0
    %119 = vmatpush1.xpose.msra.mxu0 0.0
    %120 = vmatprep.subr.mxu0 0.0
    %121 = vmatpush1.xpose.msra.mxu0 0.0
    %122 = vmatprep.subr.mxu0 0.0
    %123 = vmatpush1.xpose.msra.mxu0 0.0
    %124 = vmatprep.subr.mxu0 0.0
    %125 = vmatpush1.xpose.msra.mxu0 0.0
    %126 = vmatprep.subr.mxu0 0.0
    %127 = vmatpush1.xpose.msra.mxu0 0.0
    %128 = vmatprep.subr.mxu0 0.0
    %129 = vmatpush1.xpose.msra.mxu0 0.0
    %130 = vmatprep.subr.mxu0 0.0
    %131 = vmatpush1.xpose.msra.mxu0 0.0
    %132 = vmatprep.subr.mxu0 0.0
    %133 = vmatpush1.xpose.msra.mxu0 0.0
    %134 = vmatprep.subr.mxu0 0.0
    %135 = vmatpush1.xpose.msra.mxu0 0.0
    %136 = vmatprep.subr.mxu0 0.0
    %137 = vmatpush1.xpose.msra.mxu0 0.0
    %138 = vmatprep.subr.mxu0 0.0
    %139 = vmatpush1.xpose.msra.mxu0 0.0
    %140 = vmatprep.subr.mxu0 0.0
    %141 = vmatpush1.xpose.msra.mxu0 0.0
    %142 = vmatprep.subr.mxu0 0.0
    %143 = vmatpush1.xpose.msra.mxu0 0.0
    %144 = vmatprep.subr.mxu0 0.0
    %145 = vmatpush1.xpose.msra.mxu0 0.0
    %146 = vmatprep.subr.mxu0 0.0
    %147 = vmatpush1.xpose.msra.mxu0 0.0
    %148 = vmatprep.subr.mxu0 0.0
    %149 = vmatpush1.xpose.msra.mxu0 0.0
    %150 = vmatprep.subr.mxu0 0.0
    %151 = vmatpush1.xpose.msra.mxu0 0.0
    %152 = vmatprep.subr.mxu0 0.0
    %153 = vmatpush1.xpose.msra.mxu0 0.0
    %154 = vmatprep.subr.mxu0 0.0
    %155 = vmatpush1.xpose.msra.mxu0 0.0
    %156 = vmatprep.subr.mxu0 0.0
    %157 = vmatpush1.xpose.msra.mxu0 0.0
    %158 = vmatprep.subr.mxu0 0.0
    %159 = vmatpush1.xpose.msra.mxu0 0.0
    %160 = vmatprep.subr.mxu0 0.0
    %161 = vmatpush1.xpose.msra.mxu0 0.0
    %162 = vmatprep.subr.mxu0 0.0
    %163 = vmatpush1.xpose.msra.mxu0 0.0
    %164 = vmatprep.subr.mxu0 0.0
    %165 = vmatpush1.xpose.msra.mxu0 0.0
    %166 = vmatprep.subr.mxu0 0.0
    %167 = vmatpush1.xpose.msra.mxu0 0.0
    %168 = vmatprep.subr.mxu0 0.0
    %169 = vmatpush1.xpose.msra.mxu0 0.0
    %170 = vmatprep.subr.mxu0 0.0
    %171 = vmatpush1.xpose.msra.mxu0 0.0
    %172 = vmatprep.subr.mxu0 0.0
    %173 = vmatpush1.xpose.msra.mxu0 0.0
    %174 = vmatprep.subr.mxu0 0.0
    %175 = vmatpush1.xpose.msra.mxu0 0.0
    %176 = vmatprep.subr.mxu0 0.0
    %177 = vmatpush1.xpose.msra.mxu0 0.0
    %178 = vmatprep.mubr.f32.mxu0 0.0
    %179 = vmatmul.mubr.f32.gmra.mrb[0].mxu0 %v88
    %v180 = vpop.f32.mrb[0].mxu0
    %v181 = vadd.f32 %v49, %v180
    %v182 = vpop.f32.mrb[0].mxu0
    %183 = vmatprep.mubr.f32.mxu0 0.0
    %184 = vmatmul.mubr.f32.gmra.mrb[0].mxu0 %v91
    %v185 = vpop.f32.mrb[0].mxu0
    %v186 = vadd.f32 %v54, %v185
    %v187 = vpop.f32.mrb[0].mxu0
    %188 = vmatprep.mubr.f32.mxu0 0.0
    %189 = vmatmul.mubr.f32.gmra.mrb[0].mxu0 %v94
    %v190 = vpop.f32.mrb[0].mxu0
    %v191 = vadd.f32 %v59, %v190
    %v192 = vpop.f32.mrb[0].mxu0
    %193 = vmatprep.mubr.f32.mxu0 0.0
    %194 = vmatmul.mubr.f32.gmra.mrb[0].mxu0 %v97
    %v195 = vpop.f32.mrb[0].mxu0
    %v196 = vadd.f32 %v64, %v195
    %v197 = vpop.f32.mrb[0].mxu0
    %198 = vmatprep.mubr.f32.mxu0 0.0
    %199 = vmatmul.mubr.f32.gmra.mrb[0].mxu0 %v100
    %v200 = vpop.f32.mrb[0].mxu0
    %v201 = vadd.f32 %v69, %v200
    %v202 = vpop.f32.mrb[0].mxu0
    %203 = vmatprep.mubr.f32.mxu0 0.0
    %204 = vmatmul.mubr.f32.gmra.mrb[0].mxu0 %v103
    %v205 = vpop.f32.mrb[0].mxu0
    %v206 = vadd.f32 %v74, %v205
    %v207 = vpop.f32.mrb[0].mxu0
    %208 = vmatprep.mubr.f32.mxu0 0.0
    %209 = vmatmul.mubr.f32.gmra.mrb[0].mxu0 %v106
    %v210 = vpop.f32.mrb[0].mxu0
    %v211 = vadd.f32 %v79, %v210
    %v212 = vpop.f32.mrb[0].mxu0
    %213 = vmatprep.mubr.f32.mxu0 0.0
    %214 = vmatmul.mubr.f32.gmra.mrb[0].mxu0 %v109
    %v215 = vpop.f32.mrb[0].mxu0
    %v216 = vadd.f32 %v84, %v215
    %v217 = vpop.f32.mrb[0].mxu0
    %218 = vdwg.mxu0
    %v219 = vmul.f32 %v181, 0.01
    %v220 = vmul.f32 %v186, 0.01
    %v221 = vmul.f32 %v191, 0.01
    %v222 = vmul.f32 %v196, 0.01
    %v223 = vmul.f32 %v201, 0.01
    %v224 = vmul.f32 %v206, 0.01
    %v225 = vmul.f32 %v211, 0.01
    %v226 = vmul.f32 %v216, 0.01
    %v227 = vmax.f32 %v181, %v219
    %v228 = vmax.f32 %v186, %v220
    %v229 = vmax.f32 %v191, %v221
    %v230 = vmax.f32 %v196, %v222
    %v231 = vmax.f32 %v201, %v223
    %v232 = vmax.f32 %v206, %v224
    %v233 = vmax.f32 %v211, %v225
    %v234 = vmax.f32 %v216, %v226
    %v235 = vld [vmem:[%s3] sm:$0xff]
    %v236 = vld [vmem:[%s3 + $0x8] sm:$0xff]
    %v237 = vld [vmem:[%s3 + $0x10] sm:$0xff]
    %v238 = vld [vmem:[%s3 + $0x18] sm:$0xff]
    %v239 = vld [vmem:[%s4] sm:$0xff]
    %v240 = vld [vmem:[%s4 + $0x8] sm:$0xff]
    %v241 = vld [vmem:[%s4 + $0x10] sm:$0xff]
    %v242 = vld [vmem:[%s4 + $0x18] sm:$0xff]
    %244 = vset.pattern.permute.xlu0 0
    %245 = vperm.xlu0 %244, %v239
    %v246 = vpop.permute.xlu0 %245
    %249 = vset.pattern.permute.xlu0 0
    %250 = vperm.xlu0 %249, %v240
    %v251 = vpop.permute.xlu0 %250
    %254 = vset.pattern.permute.xlu0 0
    %255 = vperm.xlu0 %254, %v241
    %v256 = vpop.permute.xlu0 %255
    %259 = vset.pattern.permute.xlu0 0
    %260 = vperm.xlu0 %259, %v242
    %v261 = vpop.permute.xlu0 %260
    %vm263 = vcmask 523264
    %v265 = vsel %vm263, %v235, 0
    %v268 = vsel %vm263, %v236, 0
    %v271 = vsel %vm263, %v237, 0
    %v274 = vsel %vm263, %v238, 0
    %276 = vmatprep.subr.mxu0 0.0
    %277 = vmatpush1.msra.mxu0 %v227
    %278 = vmatprep.subr.mxu0 0.0
    %279 = vmatpush1.msra.mxu0 %v228
    %280 = vmatprep.subr.mxu0 0.0
    %281 = vmatpush1.msra.mxu0 %v229
    %282 = vmatprep.subr.mxu0 0.0
    %283 = vmatpush1.msra.mxu0 %v230
    %284 = vmatprep.subr.mxu0 0.0
    %285 = vmatpush1.msra.mxu0 %v231
    %286 = vmatprep.subr.mxu0 0.0
    %287 = vmatpush1.msra.mxu0 %v232
    %288 = vmatprep.subr.mxu0 0.0
    %289 = vmatpush1.msra.mxu0 %v233
    %290 = vmatprep.subr.mxu0 0.0
    %291 = vmatpush1.msra.mxu0 %v234
    %292 = vmatprep.subr.mxu0 0.0
    %293 = vmatpush1.msra.mxu0 0.0
    %294 = vmatprep.subr.mxu0 0.0
    %295 = vmatpush1.msra.mxu0 0.0
    %296 = vmatprep.subr.mxu0 0.0
    %297 = vmatpush1.msra.mxu0 0.0
    %298 = vmatprep.subr.mxu0 0.0
    %299 = vmatpush1.msra.mxu0 0.0
    %300 = vmatprep.subr.mxu0 0.0
    %301 = vmatpush1.msra.mxu0 0.0
    %302 = vmatprep.subr.mxu0 0.0
    %303 = vmatpush1.msra.mxu0 0.0
    %304 = vmatprep.subr.mxu0 0.0
    %305 = vmatpush1.msra.mxu0 0.0
    %306 = vmatprep.subr.mxu0 0.0
    %307 = vmatpush1.msra.mxu0 0.0
    %308 = vmatprep.subr.mxu0 0.0
    %309 = vmatpush1.msra.mxu0 0.0
    %310 = vmatprep.subr.mxu0 0.0
    %311 = vmatpush1.msra.mxu0 0.0
    %312 = vmatprep.subr.mxu0 0.0
    %313 = vmatpush1.msra.mxu0 0.0
    %314 = vmatprep.subr.mxu0 0.0
    %315 = vmatpush1.msra.mxu0 0.0
    %316 = vmatprep.subr.mxu0 0.0
    %317 = vmatpush1.msra.mxu0 0.0
    %318 = vmatprep.subr.mxu0 0.0
    %319 = vmatpush1.msra.mxu0 0.0
    %320 = vmatprep.subr.mxu0 0.0
    %321 = vmatpush1.msra.mxu0 0.0
    %322 = vmatprep.subr.mxu0 0.0
    %323 = vmatpush1.msra.mxu0 0.0
    %324 = vmatprep.subr.mxu0 0.0
    %325 = vmatpush1.msra.mxu0 0.0
    %326 = vmatprep.subr.mxu0 0.0
    %327 = vmatpush1.msra.mxu0 0.0
    %328 = vmatprep.subr.mxu0 0.0
    %329 = vmatpush1.msra.mxu0 0.0
    %330 = vmatprep.subr.mxu0 0.0
    %331 = vmatpush1.msra.mxu0 0.0
    %332 = vmatprep.subr.mxu0 0.0
    %333 = vmatpush1.msra.mxu0 0.0
    %334 = vmatprep.subr.mxu0 0.0
    %335 = vmatpush1.msra.mxu0 0.0
    %336 = vmatprep.subr.mxu0 0.0
    %337 = vmatpush1.msra.mxu0 0.0
    %338 = vmatprep.subr.mxu0 0.0
    %339 = vmatpush1.msra.mxu0 0.0
    %340 = vmatprep.mubr.f32.mxu0 0.0
    %341 = vmatmul.mubr.f32.gmra.mrb[0].mxu0 %v265
    %v342 = vpop.f32.mrb[0].mxu0
    %v343 = vadd.f32 %v246, %v342
    %v344 = vpop.f32.mrb[0].mxu0
    %345 = vmatprep.mubr.f32.mxu0 0.0
    %346 = vmatmul.mubr.f32.gmra.mrb[0].mxu0 %v268
    %v347 = vpop.f32.mrb[0].mxu0
    %v348 = vadd.f32 %v251, %v347
    %v349 = vpop.f32.mrb[0].mxu0
    %350 = vmatprep.mubr.f32.mxu0 0.0
    %351 = vmatmul.mubr.f32.gmra.mrb[0].mxu0 %v271
    %v352 = vpop.f32.mrb[0].mxu0
    %v353 = vadd.f32 %v256, %v352
    %v354 = vpop.f32.mrb[0].mxu0
    %355 = vmatprep.mubr.f32.mxu0 0.0
    %356 = vmatmul.mubr.f32.gmra.mrb[0].mxu0 %v274
    %v357 = vpop.f32.mrb[0].mxu0
    %v358 = vadd.f32 %v261, %v357
    %v359 = vpop.f32.mrb[0].mxu0
    %360 = vdwg.mxu0
    %v361 = vmul.f32 %v343, 0.01
    %v362 = vmul.f32 %v348, 0.01
    %v363 = vmul.f32 %v353, 0.01
    %v364 = vmul.f32 %v358, 0.01
    %v365 = vmax.f32 %v343, %v361
    %v366 = vmax.f32 %v348, %v362
    %v367 = vmax.f32 %v353, %v363
    %v368 = vmax.f32 %v358, %v364
    %v369 = vld [vmem:[%s5] sm:$0xff]
    %v370 = vld [vmem:[%s5 + $0x8] sm:$0xff]
    %v371 = vld [vmem:[%s5 + $0x10] sm:$0xff]
    %v372 = vld [vmem:[%s5 + $0x18] sm:$0xff]
    %374 = vset.pattern.permute.xlu0 0
    %375 = vperm.xlu0 %374, %v369
    %v376 = vpop.permute.xlu0 %375
    %379 = vset.pattern.permute.xlu0 0
    %380 = vperm.xlu0 %379, %v370
    %v381 = vpop.permute.xlu0 %380
    %384 = vset.pattern.permute.xlu0 0
    %385 = vperm.xlu0 %384, %v371
    %v386 = vpop.permute.xlu0 %385
    %389 = vset.pattern.permute.xlu0 0
    %390 = vperm.xlu0 %389, %v372
    %v391 = vpop.permute.xlu0 %390
    %v393 = vmul.f32 %v365, %v376
    %v394 = vmul.f32 %v366, %v381
    %v395 = vmul.f32 %v367, %v386
    %v396 = vmul.f32 %v368, %v391
    %vm397 = vcmask 15360
    %v398 = vsel %vm397, %v393, 0.0
    %v399 = vsel %vm397, %v394, 0.0
    %v400 = vadd.f32 %v398, %v399
    %v401 = vsel %vm397, %v395, 0.0
    %v402 = vadd.f32 %v400, %v401
    %v403 = vsel %vm397, %v396, 0.0
    %v404 = vadd.f32 %v402, %v403
    %v405 = vrot.slane %v404, 4
    %v406 = vadd.f32 %v404, %v405
    %v407 = vrot.slane %v406, 2
    %v408 = vadd.f32 %v406, %v407
    %v409 = vrot.slane %v408, 1
    %v410 = vadd.f32 %v408, %v409
    %v411 = vld [vmem:[#allocation2] sm:$0x1]
    %413 = vset.pattern.permute.xlu0 0
    %414 = vperm.xlu0 %413, %v411
    %v415 = vpop.permute.xlu0 %414
    %v417 = vlaneseq
    %v418 = vshrl.u32 %v417, 7
    %v419 = vsub.s32 0, %v418
    %v420 = vrot.slane %v415, %v419
    %v421 = vadd.f32 %v410, %v420
    %vm422 = vcmask 8192
    %423 = vst.msk [vmem:[#allocation3] sm:$0x1] %vm422, %v421
    // Predicated region
    $region30: #{tpu_custom_call.1} parent=1 // pred_check
      _
    $region31: #{tpu_custom_call.1} parent=1 // pred_check_branch
      %425 = sbr.rel (0) target = $region33
    $region32: #{tpu_custom_call.1} parent=1 // pred_region
      %s427 = ssub.s32 16, 16
      %428 = vsyncadd [#allocation4], %s427
      %s430 = sshll.u32 [#allocation3], 4
      %s431 = int_to_ptr.vmem [resolvable:$true] %s430
      %433 = dma.vmem_to_hbm [thread:$0]  %s431, 16, %s7, [#allocation4]
    $region33: #{tpu_custom_call.1} parent=1 // pred_fallthru
      _
    // Predicated region
    $region34: #{tpu_custom_call.1} parent=1 // pred_check
      _
    $region35: #{tpu_custom_call.1} parent=1 // pred_check_branch
      %435 = sbr.rel (0) target = $region37
    $region36: #{tpu_custom_call.1} parent=1 // pred_region
      %436 = dma.done [#allocation4], 16
    $region37: #{tpu_custom_call.1} parent=1 // pred_fallthru
      _
    %437 = vsyncpa [#allocation4], 1

</llo_original>
